<compile_context>
chip_gen: v7x
topology: tpu7x:2x2x1
jax: 0.10.0
libtpu: 0.0.40
codegen_flags: <defaults>
</compile_context>

<pallas_src>
import jax
import jax.numpy as jnp
from jax.experimental import pallas as pl
from jax.experimental.pallas import tpu as pltpu

_LANE = 128
_SPLIT_BATCH = 2048              # above this, use >= 2 tiles (v7x megacore)
_VMEM_BUFFER_BUDGET = 24 << 20   # bytes of double-buffered pipeline buffers
_XLA_FALLBACK_ELEMS = 1 << 17    # below this many x elements, plain XLA wins


def _round_up(n, m):
    return ((n + m - 1) // m) * m


def _cdiv(a, b):
    return (a + b - 1) // b


def _choose_tile_b(batch, n_feature, itemsize):
    """Pick a lane-tile size from a VMEM byte budget (not a fixed constant)."""
    # Sublane padding of a VMEM tile: 8 rows for 32-bit, 16 for 16-bit, ...
    sublane = 8 * max(1, 4 // itemsize)
    f_pad = _round_up(max(n_feature, 1), sublane)
    # Per output-lane VMEM cost: double-buffered (F, tile_b) x block
    # + double-buffered (1, tile_b) output row (both sublane-padded).
    bytes_per_lane = 2 * (f_pad + sublane) * itemsize
    tile_cap = max(_LANE, (_VMEM_BUFFER_BUDGET // bytes_per_lane) // _LANE * _LANE)
    if batch >= _SPLIT_BATCH:
        # Keep >= 2 tiles so both v7x TensorCores get work and the DMA
        # pipeline has steps to overlap.
        target = _round_up(_cdiv(batch, 2), _LANE)
    else:
        # Whole (128-rounded) batch in one tile: no dead columns, no pad copy.
        target = _round_up(batch, _LANE)
    return min(tile_cap, max(_LANE, target)), bytes_per_lane


def _linear_kernel(x_ref, w_ref, b_ref, o_ref):
    # x_ref: (F, TILE_B) VMEM   -- batch on lanes
    # w_ref: (F,)        SMEM   -- scalar weights
    # b_ref: (1,)        SMEM   -- scalar bias
    # o_ref: (1, TILE_B) VMEM   -- lane-dense output row
    n_feature = x_ref.shape[0]
    acc = jnp.full(o_ref.shape, b_ref[0], dtype=jnp.float32)
    # Static unroll over the (small) feature axis: SMEM scalar splat * lane
    # row, accumulated in f32.  Pure VPU work, no broadcasts materialized,
    # no cross-lane ops, no MXU.
    for k in range(n_feature):
        acc = acc + w_ref[k] * x_ref[pl.ds(k, 1), :].astype(jnp.float32)
    o_ref[...] = acc.astype(o_ref.dtype)


def linear_net_forward(x, weight, bias, *, force_pallas=False):
    """Forward for LinearNet: y = x @ W^T + b.

    Args:
      x:      [batch, n_feature]
      weight: [1, n_feature]   (PyTorch nn.Linear layout)
      bias:   [1]
      force_pallas: skip the small-problem XLA fallback (used for testing).
    Returns:
      y:      [batch, 1]  (same dtype as x)
    """
    batch, n_feature = x.shape
    out_dtype = x.dtype

    if not force_pallas and batch * n_feature < _XLA_FALLBACK_ELEMS:
        # Tiny problems: launch + layout plumbing dominate; the fused XLA dot
        # is strictly faster.
        y = jnp.dot(x, weight.reshape(n_feature, 1),
                    preferred_element_type=jnp.float32)
        return (y + bias.astype(jnp.float32)).astype(out_dtype)

    itemsize = jnp.dtype(x.dtype).itemsize
    tile_b, bytes_per_lane = _choose_tile_b(batch, n_feature, itemsize)
    n_tiles = _cdiv(batch, tile_b)
    padded = n_tiles * tile_b

    # Layout plumbing only (batch -> lane axis).  allow_input_fusion below
    # lets XLA fold this into the pallas_call operand instead of materializing
    # an extra HBM copy of x.  No jnp.pad: the boundary block is clipped.
    x_t = x.T                                            # (F, batch)

    w_smem = weight.reshape(-1).astype(jnp.float32)      # (F,)  SMEM scalars
    b_smem = bias.reshape(-1).astype(jnp.float32)        # (1,)  SMEM scalar

    cost = pl.CostEstimate(
        flops=2 * batch * n_feature,
        transcendentals=0,
        bytes_accessed=itemsize * batch * n_feature
        + 4 * (n_feature + 1)
        + jnp.dtype(out_dtype).itemsize * batch,
    )

    # Raise the scoped VMEM limit to back the multi-MiB blocks (v5e default is
    # only 16 MiB); keep it <= 48 MiB so it also fits v7x's 64 MiB physical.
    vmem_limit = int(min(48 << 20,
                         max(16 << 20, bytes_per_lane * tile_b + (8 << 20))))

    y_row = pl.pallas_call(
        _linear_kernel,
        out_shape=jax.ShapeDtypeStruct((1, padded), out_dtype),
        grid_spec=pltpu.PrefetchScalarGridSpec(
            num_scalar_prefetch=0,
            grid=(n_tiles,),
            in_specs=[
                # x^T tile: full feature extent on sublanes, batch tile on
                # lanes.  Boundary block is clipped (garbage lanes sliced off
                # in the wrapper).
                pl.BlockSpec((n_feature, tile_b), lambda i: (0, i)),
                # Scalar weights + bias in SMEM (whole arrays, no blocking).
                pl.BlockSpec(memory_space=pltpu.MemorySpace.SMEM),
                pl.BlockSpec(memory_space=pltpu.MemorySpace.SMEM),
            ],
            out_specs=pl.BlockSpec((1, tile_b), lambda i: (0, i)),
        ),
        compiler_params=pltpu.CompilerParams(
            # Batch tiles are independent -> shard across TCs on v7x.
            dimension_semantics=("parallel",),
            vmem_limit_bytes=vmem_limit,
            # Let XLA fuse the x transpose into the operand (x only).
            allow_input_fusion=[True, False, False],
        ),
        cost_estimate=cost,
    )(x_t, w_smem, b_smem)

    # Columns >= batch (clipped boundary block) hold garbage and are dropped.
    return y_row[0, :batch].reshape(batch, 1)


if __name__ == "__main__":
    key = jax.random.PRNGKey(0)
    kx, kw, kb, kx2 = jax.random.split(key, 4)

    # Small shapes consistent with the module (linear regression: few features).
    batch, n_feature = 8, 2
    x = jax.random.normal(kx, (batch, n_feature), dtype=jnp.float32)
    weight = jax.random.uniform(
        kw, (1, n_feature), dtype=jnp.float32, minval=-0.5, maxval=0.5
    )
    bias = jax.random.uniform(
        kb, (1,), dtype=jnp.float32, minval=-0.5, maxval=0.5
    )

    # Force the Pallas path (the auto fallback would route these tiny demo
    # shapes to plain XLA).
    y = linear_net_forward(x, weight, bias, force_pallas=True)
    jax.block_until_ready(y)
    y_ref = x @ weight.T + bias
    assert y.shape == (batch, 1)
    assert jnp.allclose(y, y_ref, atol=1e-5, rtol=1e-5)

    # batch not a multiple of 128: exercises the un-padded clipped boundary block.
    batch2 = 600
    x2 = jax.random.normal(kx2, (batch2, n_feature), dtype=jnp.float32)
    y2 = linear_net_forward(x2, weight, bias, force_pallas=True)
    jax.block_until_ready(y2)
    y2_ref = x2 @ weight.T + bias
    assert y2.shape == (batch2, 1)
    assert jnp.allclose(y2, y2_ref, atol=1e-5, rtol=1e-5)

    # Auto path (small-problem XLA fallback) for completeness.
    y3 = linear_net_forward(x2, weight, bias)
    jax.block_until_ready(y3)
    assert jnp.allclose(y3, y2_ref, atol=1e-5, rtol=1e-5)

    print("KERNEL_OK")
</pallas_src>

<mosaic_0001>
module attributes {stable_mosaic.version = 11 : i64} {
  func.func @_linear_kernel(%arg0: i32, %arg1: memref<2x128xf32, #tpu.memory_space<vmem>>, %arg2: memref<2xf32, #tpu.memory_space<smem>>, %arg3: memref<1xf32, #tpu.memory_space<smem>>, %arg4: memref<1x128xf32, #tpu.memory_space<vmem>>) attributes {dimension_semantics = [#tpu.dimension_semantics<parallel>], iteration_bounds = array<i64: 1>, scalar_prefetch = 0 : i64, scratch_operands = 0 : i64, tpu.core_type = #tpu.core_type<tc>, window_params = [{transform_indices = @transform_0, window_bounds = array<i64: 2, 128>}, {transform_indices = @transform_1, window_bounds = array<i64: 2>}, {transform_indices = @transform_2, window_bounds = array<i64: 1>}, {transform_indices = @transform_3, window_bounds = array<i64: 1, 128>}]} {
    %c0 = arith.constant 0 : index
    %0 = memref.load %arg3[%c0] : memref<1xf32, #tpu.memory_space<smem>>
    %1 = vector.broadcast %0 : f32 to vector<1x128xf32>
    %c0_0 = arith.constant 0 : index
    %2 = memref.load %arg2[%c0_0] : memref<2xf32, #tpu.memory_space<smem>>
    %c0_1 = arith.constant 0 : index
    %c0_2 = arith.constant 0 : index
    %3 = vector.load %arg1[%c0_1, %c0_2] : memref<2x128xf32, #tpu.memory_space<vmem>>, vector<1x128xf32>
    %4 = vector.broadcast %2 : f32 to vector<1x128xf32>
    %5 = arith.mulf %4, %3 : vector<1x128xf32>
    %6 = arith.addf %1, %5 : vector<1x128xf32>
    %c1 = arith.constant 1 : index
    %7 = memref.load %arg2[%c1] : memref<2xf32, #tpu.memory_space<smem>>
    %c1_3 = arith.constant 1 : index
    %c0_4 = arith.constant 0 : index
    %8 = vector.load %arg1[%c1_3, %c0_4] : memref<2x128xf32, #tpu.memory_space<vmem>>, vector<1x128xf32>
    %9 = vector.broadcast %7 : f32 to vector<1x128xf32>
    %10 = arith.mulf %9, %8 : vector<1x128xf32>
    %11 = arith.addf %6, %10 : vector<1x128xf32>
    %c0_5 = arith.constant 0 : index
    %c0_6 = arith.constant 0 : index
    %12 = vector.load %arg4[%c0_5, %c0_6] : memref<1x128xf32, #tpu.memory_space<vmem>>, vector<1x128xf32>
    tpu.vector_store %arg4[%c0_5, %c0_6], %11 {strides = array<i32>} : memref<1x128xf32, #tpu.memory_space<vmem>>, vector<1x128xf32>,
    return
  }
  func.func @transform_0(%arg0: i32) -> (i32, i32) {
    %c0_i32 = arith.constant 0 : i32
    %c0_i32_0 = arith.constant 0 : i32
    return %c0_i32, %arg0 : i32, i32
  }
  func.func @transform_1(%arg0: i32) -> i32 {
    %c0_i32 = arith.constant 0 : i32
    %c0_i32_0 = arith.constant 0 : i32
    return %c0_i32 : i32
  }
  func.func @transform_2(%arg0: i32) -> i32 {
    %c0_i32 = arith.constant 0 : i32
    %c0_i32_0 = arith.constant 0 : i32
    return %c0_i32 : i32
  }
  func.func @transform_3(%arg0: i32) -> (i32, i32) {
    %c0_i32 = arith.constant 0 : i32
    %c0_i32_0 = arith.constant 0 : i32
    return %c0_i32, %arg0 : i32, i32
  }
}

</mosaic_0001>

<llo_original>
// kernel: tpu_custom_call.1
$region0: #{tpu_custom_call.1}
  #allocation0 [shape = 'u32[]', space=smem, size = 0x4, offset = 0x4, fixed_abs, tag = 'smem constant byte address 0x4 - core index']
  #allocation1 [shape = 'u32[144,128]{1,0:T(1,128)}', space=vmem, size = 0x12000, scoped, tag = 'internal scratch']
  #allocation2 [shape = 'f32[1]{0:T(128)S(6)}', space=smem, size = 0x200, scoped, tag = 'scoped memory for tpu_custom_call.1']
  %s0 = inlined_call_operand.vmem [shape: f32[2,8], index: 0, kind: input, shape index: {}]
  %s1 = inlined_call_operand.vmem [shape: f32[2], index: 1, kind: input, shape index: {}]
  %s2 = inlined_call_operand.<no memory space> [shape: f32[1], index: 2, kind: input, shape index: {}]
  %s3 = inlined_call_operand.hbm [shape: f32[1,128], index: 3, kind: output, shape index: {}]
  %s4 = sld [smem:[#allocation0]]
  $region26: #{tpu_custom_call.1} parent=0
    _
  %s6 = ssub.s32 1, %s4
  %s7 = scalar_select 0, %s6, %s4
  %8 = sst [smem:[#allocation2]] %s2
  $region1: #{tpu_custom_call.1} parent=0
    #allocation3 [shape = 'u8[512]{0}', space=smem, size = 0x200, scoped, tag = 'input window, operand 1, single buffered']
    #allocation4 [shape = 's32[1]{0}', space=sflag, size = 0x4, scoped, tag = 'scoped memory for tpu_custom_call.1']
    #allocation5 [shape = 's32[1]{0}', space=sflag, size = 0x4, scoped, tag = 'scoped memory for tpu_custom_call.1']
    #allocation6 [shape = 'u8[512]{0}', space=vmem, size = 0x400, scoped, tag = 'output window, operand 0, single buffered']
    %9 = vsyncpa [#allocation5], 0
    %10 = vsyncpa [#allocation4], 0
    // Predicated region
    $region2: #{tpu_custom_call.1} parent=1 // pred_check
      _
    $region3: #{tpu_custom_call.1} parent=1 // pred_check_branch
      %12 = sbr.rel (0) target = $region5
    $region4: #{tpu_custom_call.1} parent=1 // pred_region
      _
    $region5: #{tpu_custom_call.1} parent=1 // pred_fallthru
      _
    // Predicated region
    $region6: #{tpu_custom_call.1} parent=1 // pred_check
      _
    $region7: #{tpu_custom_call.1} parent=1 // pred_check_branch
      %14 = sbr.rel (0) target = $region9
    $region8: #{tpu_custom_call.1} parent=1 // pred_region
      %s16 = ssub.s32 16, 16
      %17 = vsyncadd [#allocation5], %s16
      %s19 = sshll.u32 %s1, 4
      %s20 = int_to_ptr.vmem [resolvable:$true] %s19
      %22 = dma.vmem_to_smem %s20, 16, [#allocation3], [#allocation5]
    $region9: #{tpu_custom_call.1} parent=1 // pred_fallthru
      _
    // Predicated region
    $region10: #{tpu_custom_call.1} parent=1 // pred_check
      _
    $region11: #{tpu_custom_call.1} parent=1 // pred_check_branch
      %24 = sbr.rel (0) target = $region13
    $region12: #{tpu_custom_call.1} parent=1 // pred_region
      _
    $region13: #{tpu_custom_call.1} parent=1 // pred_fallthru
      _
    // Predicated region
    $region14: #{tpu_custom_call.1} parent=1 // pred_check
      _
    $region15: #{tpu_custom_call.1} parent=1 // pred_check_branch
      %26 = sbr.rel (0) target = $region17
    $region16: #{tpu_custom_call.1} parent=1 // pred_region
      %27 = dma.done [#allocation5], 16
    $region17: #{tpu_custom_call.1} parent=1 // pred_fallthru
      _
    %28 = sfence
    %s29 = sld [smem:[#allocation2]]
    %v30 = vstv %s29
    %s31 = sld [smem:[#allocation3]]
    %v32 = vld [vmem:[%s0] sm:$0x1]
    %v33 = vstv %s31
    %v34 = vmul.f32 %v33, %v32
    %v35 = vadd.f32 %v30, %v34
    %s36 = sld [smem:[#allocation3 + $0x1]]
    %v37 = vld [vmem:[%s0 + $0x1] sm:$0x1]
    %v38 = vstv %s36
    %v39 = vmul.f32 %v38, %v37
    %v40 = vadd.f32 %v35, %v39
    %41 = vst [vmem:[#allocation6] sm:$0x1] %v40
    // Predicated region
    $region18: #{tpu_custom_call.1} parent=1 // pred_check
      _
    $region19: #{tpu_custom_call.1} parent=1 // pred_check_branch
      %43 = sbr.rel (0) target = $region21
    $region20: #{tpu_custom_call.1} parent=1 // pred_region
      %s45 = ssub.s32 16, 16
      %46 = vsyncadd [#allocation4], %s45
      %s48 = sshll.u32 [#allocation6], 4
      %s49 = int_to_ptr.vmem [resolvable:$true] %s48
      %51 = dma.vmem_to_hbm [thread:$0]  %s49, 16, %s3, [#allocation4]
    $region21: #{tpu_custom_call.1} parent=1 // pred_fallthru
      _
    // Predicated region
    $region22: #{tpu_custom_call.1} parent=1 // pred_check
      _
    $region23: #{tpu_custom_call.1} parent=1 // pred_check_branch
      %53 = sbr.rel (0) target = $region25
    $region24: #{tpu_custom_call.1} parent=1 // pred_region
      %54 = dma.done [#allocation4], 16
    $region25: #{tpu_custom_call.1} parent=1 // pred_fallthru
      _
    %55 = vsyncpa [#allocation4], 1
    %56 = vsyncpa [#allocation5], 1

</llo_original>
